<compile_context>
chip_gen: v5e
topology: v5e:2x2
jax: 0.10.0
libtpu: 0.0.40
codegen_flags: <defaults>
</compile_context>

<pallas_src>
import math
import functools

import jax
import jax.numpy as jnp
from jax.experimental import pallas as pl
from jax.experimental.pallas import tpu as pltpu


def _round_up(x, m):
    return (x + m - 1) // m * m


# --------------------------------------------------------------------------
# Kernels
# --------------------------------------------------------------------------

def _sine_default_kernel(x_ref, w_ref, b_ref, o_ref, *, omega_0):
    # x: (tm, K), w: (K, tn)  ->  MXU matmul, f32 accumulation.
    y = jnp.dot(x_ref[...], w_ref[...], preferred_element_type=jnp.float32)
    y = y + b_ref[...]                               # (tm, tn) + (1, tn)
    o_ref[...] = jnp.sin(omega_0 * y).astype(o_ref.dtype)


def _sine_mod_static_kernel(x_ref, w_ref, b_ref, o_ref, *, exp_a, scale, c, d):
    # a/b/c/d are Python floats: exp(a), exp(b)*omega_0 folded into immediates.
    y = jnp.dot(x_ref[...], w_ref[...], preferred_element_type=jnp.float32)
    y = y + b_ref[...]
    o_ref[...] = (exp_a * jnp.sin(scale * y + c) + d).astype(o_ref.dtype)


def _sine_mod_smem_kernel(params_ref, x_ref, w_ref, b_ref, o_ref):
    # params_ref (SMEM): [exp(a), exp(b)*omega_0, c, d]  (exps hoisted to wrapper)
    exp_a = params_ref[0]
    scale = params_ref[1]
    c = params_ref[2]
    d = params_ref[3]
    y = jnp.dot(x_ref[...], w_ref[...], preferred_element_type=jnp.float32)
    y = y + b_ref[...]
    o_ref[...] = (exp_a * jnp.sin(scale * y + c) + d).astype(o_ref.dtype)


# --------------------------------------------------------------------------
# Parameter prep (run ONCE per layer, not per forward call)
# --------------------------------------------------------------------------

def prepare_sine_layer_params(weight, bias=None, lane_multiple=128,
                              io_dtype=None):
    """weight: (out_features, in_features) torch layout; bias: (out_features,).

    Returns (w_kn, bias_2d): weight padded on out_features to `lane_multiple`
    and pre-transposed to (K, Npad); bias padded and reshaped to (1, Npad).
    """
    N, K = weight.shape
    Npad = _round_up(N, lane_multiple)
    if bias is None:
        bias = jnp.zeros((N,), jnp.float32)
    w = weight
    b = bias.astype(jnp.float32)
    if Npad != N:
        w = jnp.pad(w, ((0, Npad - N), (0, 0)))
        b = jnp.pad(b, (0, Npad - N))
    w_kn = jnp.transpose(w)                          # (K, Npad)
    if io_dtype is not None:
        w_kn = w_kn.astype(io_dtype)
    return w_kn, b.reshape(1, Npad)


# --------------------------------------------------------------------------
# Tile selection / VMEM budgeting
# --------------------------------------------------------------------------

def _vmem_capacity_bytes():
    try:
        return int(pltpu.get_tpu_info().vmem_capacity_bytes)
    except Exception:
        return 64 * 1024 * 1024                      # conservative (v7x per-TC)


def _tile_bytes(tm, tn, K, in_bytes, out_bytes):
    return (2 * tm * K * in_bytes                    # x tiles (double-buffered)
            + 2 * K * tn * in_bytes                  # weight tiles
            + 2 * tm * tn * out_bytes                # output tiles
            + 2 * tn * 4)                            # bias


def _choose_tiles(B, K, Npad, tm_req, tn_req, in_bytes, out_bytes, vmem_cap):
    budget = int(0.7 * vmem_cap)
    tm = _round_up(min(int(tm_req), _round_up(B, 8)), 8)
    if B >= 256:
        # >= 2 batch tiles so a 2-TensorCore chip (v7x) can shard the grid.
        tm = min(tm, _round_up(pl.cdiv(B, 2), 8))
    tn = Npad if tn_req is None else min(int(tn_req), Npad)
    tn = _round_up(tn, 128)
    # Shrink tn until the double-buffered weight tile fits half the budget.
    while tn > 128 and 2 * K * tn * in_bytes > budget // 2:
        tn = _round_up(max(128, tn // 2), 128)
    # Shrink tm until everything fits the budget.
    while tm > 8 and _tile_bytes(tm, tn, K, in_bytes, out_bytes) > budget:
        tm = _round_up(max(8, tm // 2), 8)
    return tm, tn


# --------------------------------------------------------------------------
# Forward
# --------------------------------------------------------------------------

def sine_layer_forward(x, w_kn, bias_2d, out_features, omega_0=30.0,
                       a_param=None, b_param=None, c_param=None, d_param=None,
                       tm=2048, tn=None, io_dtype=None, out_dtype=None,
                       vmem_limit_bytes=None):
    """x: (B, in_features); w_kn/bias_2d from prepare_sine_layer_params().
    Returns (B, out_features)."""
    B, K = x.shape
    K2, Npad = w_kn.shape
    assert K == K2 and bias_2d.shape == (1, Npad)
    N = out_features
    assert N <= Npad

    out_dtype = out_dtype or x.dtype

    # Optional bf16 I/O to cut HBM traffic / use the native bf16 MXU path.
    if io_dtype is not None:
        x = x.astype(io_dtype)
        w_kn = w_kn.astype(io_dtype)
    bias_2d = bias_2d.astype(jnp.float32)            # added post f32 accumulation

    in_bytes = jnp.dtype(x.dtype).itemsize
    out_bytes = jnp.dtype(out_dtype).itemsize
    vmem_cap = _vmem_capacity_bytes()
    tm, tn = _choose_tiles(B, K, Npad, tm, tn, in_bytes, out_bytes, vmem_cap)

    needed = _tile_bytes(tm, tn, K, in_bytes, out_bytes)
    limit = vmem_limit_bytes or min(int(0.9 * vmem_cap),
                                    max(needed + needed // 2 + (2 << 20),
                                        16 << 20))

    # Grid: batch tiles (x streamed, re-used across N tiles since N is the
    # fast axis) x N tiles (weight streamed).  No reduction axis (K untiled).
    grid = (pl.cdiv(B, tm), pl.cdiv(Npad, tn))
    x_spec = pl.BlockSpec((tm, K), lambda i, j: (i, 0))
    w_spec = pl.BlockSpec((K, tn), lambda i, j: (0, j))
    b_spec = pl.BlockSpec((1, tn), lambda i, j: (0, j))
    o_spec = pl.BlockSpec((tm, tn), lambda i, j: (i, j))

    compiler_params = pltpu.CompilerParams(
        dimension_semantics=("parallel", "parallel"),
        vmem_limit_bytes=int(limit))
    cost = pl.CostEstimate(
        flops=2 * B * Npad * K,
        transcendentals=B * Npad,
        bytes_accessed=(B * K * in_bytes + K * Npad * in_bytes
                        + Npad * 4 + B * Npad * out_bytes))

    mod_params = (a_param, b_param, c_param, d_param)
    use_default = all(p is None for p in mod_params)
    static_mod = (not use_default) and all(
        isinstance(p, (int, float)) for p in mod_params)

    out_shape = jax.ShapeDtypeStruct((B, Npad), out_dtype)

    if use_default:
        kernel = functools.partial(_sine_default_kernel, omega_0=float(omega_0))
        out = pl.pallas_call(
            kernel,
            out_shape=out_shape,
            grid_spec=pltpu.PrefetchScalarGridSpec(
                num_scalar_prefetch=0, grid=grid,
                in_specs=[x_spec, w_spec, b_spec],
                out_specs=o_spec),
            compiler_params=compiler_params,
            cost_estimate=cost,
        )(x, w_kn, bias_2d)
    elif static_mod:
        # Python-float params: fold exp(a), exp(b)*omega_0 into immediates.
        kernel = functools.partial(
            _sine_mod_static_kernel,
            exp_a=math.exp(float(a_param)),
            scale=math.exp(float(b_param)) * float(omega_0),
            c=float(c_param), d=float(d_param))
        out = pl.pallas_call(
            kernel,
            out_shape=out_shape,
            grid_spec=pltpu.PrefetchScalarGridSpec(
                num_scalar_prefetch=0, grid=grid,
                in_specs=[x_spec, w_spec, b_spec],
                out_specs=o_spec),
            compiler_params=compiler_params,
            cost_estimate=cost,
        )(x, w_kn, bias_2d)
    else:
        # Traced (learned) params: hoist the scalar exps out of the kernel.
        a_ = jnp.asarray(a_param, jnp.float32)
        b_ = jnp.asarray(b_param, jnp.float32)
        params = jnp.stack([
            jnp.exp(a_),
            jnp.exp(b_) * jnp.float32(omega_0),
            jnp.asarray(c_param, jnp.float32),
            jnp.asarray(d_param, jnp.float32),
        ])
        out = pl.pallas_call(
            _sine_mod_smem_kernel,
            out_shape=out_shape,
            grid_spec=pltpu.PrefetchScalarGridSpec(
                num_scalar_prefetch=0, grid=grid,
                in_specs=[pl.BlockSpec(memory_space=pltpu.MemorySpace.SMEM),
                          x_spec, w_spec, b_spec],
                out_specs=o_spec),
            compiler_params=compiler_params,
            cost_estimate=cost,
        )(params, x, w_kn, bias_2d)

    if Npad != N:
        out = out[:, :N]    # only when out_features isn't a lane multiple
    return out


def sine_layer(x, weight, bias, omega_0=30.0, **kw):
    """Convenience: torch-layout weight (N, K) / bias (N,). For repeated use
    call prepare_sine_layer_params once and sine_layer_forward directly."""
    w_kn, b2d = prepare_sine_layer_params(weight, bias,
                                          io_dtype=kw.get("io_dtype"))
    return sine_layer_forward(x, w_kn, b2d, weight.shape[0], omega_0, **kw)


# --------------------------------------------------------------------------
# Reference + tests
# --------------------------------------------------------------------------

def _reference(x, weight, bias, omega_0, a=None, b=None, c=None, d=None):
    y = x @ weight.T + bias
    if a is None and b is None and c is None and d is None:
        return jnp.sin(omega_0 * y)
    return jnp.exp(a) * jnp.sin(jnp.exp(b) * omega_0 * y + c) + d


if __name__ == "__main__":
    key = jax.random.PRNGKey(0)
    k_x, k_w, k_b, k_x2, k_w2, k_b2 = jax.random.split(key, 6)

    in_features = 32
    out_features = 64
    batch = 16
    omega_0 = 30.0

    # Deterministic init mirroring SineLayer.init_weights (not is_first case).
    bound = math.sqrt(6.0 / in_features) / omega_0
    weight = jax.random.uniform(k_w, (out_features, in_features),
                                dtype=jnp.float32, minval=-bound, maxval=bound)
    bbound = 1.0 / math.sqrt(in_features)
    bias = jax.random.uniform(k_b, (out_features,),
                              dtype=jnp.float32, minval=-bbound, maxval=bbound)
    x = jax.random.normal(k_x, (batch, in_features), dtype=jnp.float32)

    w_kn, b2d = prepare_sine_layer_params(weight, bias)

    # 1) Default path -> sin(omega_0 * linear(x))
    out_default = sine_layer_forward(x, w_kn, b2d, out_features, omega_0)
    jax.block_until_ready(out_default)
    ref_default = _reference(x, weight, bias, omega_0)
    assert out_default.shape == (batch, out_features)
    assert jnp.allclose(out_default, ref_default, atol=1e-4, rtol=1e-4)

    # 2) Modulated path, static Python floats (constants baked into kernel).
    a_p, b_p, c_p, d_p = 0.1, -0.05, 0.3, 0.2
    out_mod = sine_layer_forward(x, w_kn, b2d, out_features, omega_0,
                                 a_param=a_p, b_param=b_p,
                                 c_param=c_p, d_param=d_p)
    jax.block_until_ready(out_mod)
    ref_mod = _reference(x, weight, bias, omega_0, a_p, b_p, c_p, d_p)
    assert out_mod.shape == (batch, out_features)
    assert jnp.allclose(out_mod, ref_mod, atol=1e-4, rtol=1e-4)

    # 3) Modulated path, traced (learned) params -> SMEM params kernel.
    out_mod_t = sine_layer_forward(
        x, w_kn, b2d, out_features, omega_0,
        a_param=jnp.float32(a_p), b_param=jnp.float32(b_p),
        c_param=jnp.float32(c_p), d_param=jnp.float32(d_p))
    jax.block_until_ready(out_mod_t)
    assert jnp.allclose(out_mod_t, ref_mod, atol=1e-4, rtol=1e-4)

    # 4) Ragged batch + N-tiled grid: exercises masked last batch tile and
    #    multi-step grid over both batch and out_features.
    out_features2 = 256
    batch2 = 40
    weight2 = jax.random.uniform(k_w2, (out_features2, in_features),
                                 dtype=jnp.float32, minval=-bound, maxval=bound)
    bias2 = jax.random.uniform(k_b2, (out_features2,),
                               dtype=jnp.float32, minval=-bbound, maxval=bbound)
    x2 = jax.random.normal(k_x2, (batch2, in_features), dtype=jnp.float32)
    w_kn2, b2d2 = prepare_sine_layer_params(weight2, bias2)
    out_ragged = sine_layer_forward(x2, w_kn2, b2d2, out_features2, omega_0,
                                    tm=16, tn=128)
    jax.block_until_ready(out_ragged)
    ref_ragged = _reference(x2, weight2, bias2, omega_0)
    assert out_ragged.shape == (batch2, out_features2)
    assert jnp.allclose(out_ragged, ref_ragged, atol=1e-4, rtol=1e-4)

    # 5) bf16 I/O path (HBM-traffic reduction); compare against the reference
    #    evaluated on the same bf16-cast inputs (both accumulate in f32).
    x_bf = x.astype(jnp.bfloat16).astype(jnp.float32)
    w_bf = weight.astype(jnp.bfloat16).astype(jnp.float32)
    out_bf16 = sine_layer_forward(x, w_kn, b2d, out_features, omega_0,
                                  io_dtype=jnp.bfloat16)
    jax.block_until_ready(out_bf16)
    ref_bf16 = _reference(x_bf, w_bf, bias, omega_0)
    assert jnp.allclose(out_bf16, ref_bf16, atol=1e-3, rtol=1e-3)

    print("KERNEL_OK")
</pallas_src>

<mosaic_0001>
module attributes {stable_mosaic.version = 11 : i64} {
  func.func @_sine_default_kernel(%arg0: i32, %arg1: i32, %arg2: memref<16x32xf32, #tpu.memory_space<vmem>>, %arg3: memref<32x128xf32, #tpu.memory_space<vmem>>, %arg4: memref<1x128xf32, #tpu.memory_space<vmem>>, %arg5: memref<16x128xf32, #tpu.memory_space<vmem>>) attributes {dimension_semantics = [#tpu.dimension_semantics<parallel>, #tpu.dimension_semantics<parallel>], iteration_bounds = array<i64: 1, 1>, scalar_prefetch = 0 : i64, scratch_operands = 0 : i64, tpu.core_type = #tpu.core_type<tc>, window_params = [{transform_indices = @transform_0, window_bounds = array<i64: 16, 32>}, {transform_indices = @transform_1, window_bounds = array<i64: 32, 128>}, {transform_indices = @transform_2, window_bounds = array<i64: 1, 128>}, {transform_indices = @transform_3, window_bounds = array<i64: 16, 128>}]} {
    %c0 = arith.constant 0 : index
    %c0_0 = arith.constant 0 : index
    %0 = vector.load %arg2[%c0, %c0_0] : memref<16x32xf32, #tpu.memory_space<vmem>>, vector<16x32xf32>
    %c0_1 = arith.constant 0 : index
    %c0_2 = arith.constant 0 : index
    %1 = vector.load %arg3[%c0_1, %c0_2] : memref<32x128xf32, #tpu.memory_space<vmem>>, vector<32x128xf32>
    %cst = arith.constant dense<0.000000e+00> : vector<16x128xf32>
    %2 = tpu.matmul %0, %1, %cst {dimension_numbers = #tpu.dot_dimension_numbers<[1], [0], [0], [1], [0, 0, 1, 1], [], []>} : vector<16x32xf32>, vector<32x128xf32>, vector<16x128xf32> -> vector<16x128xf32>
    %c0_3 = arith.constant 0 : index
    %c0_4 = arith.constant 0 : index
    %3 = vector.load %arg4[%c0_3, %c0_4] : memref<1x128xf32, #tpu.memory_space<vmem>>, vector<1x128xf32>
    %4 = vector.broadcast %3 : vector<1x128xf32> to vector<16x128xf32>
    %5 = arith.addf %2, %4 : vector<16x128xf32>
    %cst_5 = arith.constant 3.000000e+01 : f32
    %6 = vector.broadcast %cst_5 : f32 to vector<16x128xf32>
    %7 = arith.mulf %6, %5 : vector<16x128xf32>
    %8 = math.sin %7 : vector<16x128xf32>
    %c0_6 = arith.constant 0 : index
    %c0_7 = arith.constant 0 : index
    %9 = vector.load %arg5[%c0_6, %c0_7] : memref<16x128xf32, #tpu.memory_space<vmem>>, vector<16x128xf32>
    tpu.vector_store %arg5[%c0_6, %c0_7], %8 {strides = array<i32>} : memref<16x128xf32, #tpu.memory_space<vmem>>, vector<16x128xf32>,
    return
  }
  func.func @transform_0(%arg0: i32, %arg1: i32) -> (i32, i32) {
    %c0_i32 = arith.constant 0 : i32
    %c0_i32_0 = arith.constant 0 : i32
    return %arg0, %c0_i32 : i32, i32
  }
  func.func @transform_1(%arg0: i32, %arg1: i32) -> (i32, i32) {
    %c0_i32 = arith.constant 0 : i32
    %c0_i32_0 = arith.constant 0 : i32
    return %c0_i32, %arg1 : i32, i32
  }
  func.func @transform_2(%arg0: i32, %arg1: i32) -> (i32, i32) {
    %c0_i32 = arith.constant 0 : i32
    %c0_i32_0 = arith.constant 0 : i32
    return %c0_i32, %arg1 : i32, i32
  }
  func.func @transform_3(%arg0: i32, %arg1: i32) -> (i32, i32) {
    %c0_i32 = arith.constant 0 : i32
    return %arg0, %arg1 : i32, i32
  }
}

</mosaic_0001>

<llo_original>
// kernel: tpu_custom_call.1
$region0: #{tpu_custom_call.1}
  #allocation0 [shape = 'u32[]', space=smem, size = 0x4, offset = 0x4, fixed_abs, tag = 'smem constant byte address 0x4 - core index']
  #allocation1 [shape = 'u32[72,128]{1,0:T(1,128)}', space=vmem, size = 0x9000, scoped, tag = 'internal scratch']
  %s0 = inlined_call_operand.hbm [shape: f32[16,32], index: 0, kind: input, shape index: {}]
  %s1 = inlined_call_operand.hbm [shape: f32[32,128], index: 1, kind: input, shape index: {}]
  %s2 = inlined_call_operand.vmem [shape: f32[1,128], index: 2, kind: input, shape index: {}]
  %s3 = inlined_call_operand.hbm [shape: f32[16,128], index: 3, kind: output, shape index: {}]
  %s4 = sld [smem:[#allocation0]]
  $region30: #{tpu_custom_call.1} parent=0
    _
  %s6 = ssub.s32 1, %s4
  %s7 = scalar_select 0, %s6, %s4
  $region1: #{tpu_custom_call.1} parent=0
    #allocation2 [shape = 'u8[8192]{0}', space=vmem, size = 0x2000, scoped, tag = 'input window, operand 0, single buffered']
    #allocation3 [shape = 's32[1]{0}', space=sflag, size = 0x4, scoped, tag = 'scoped memory for tpu_custom_call.1']
    #allocation4 [shape = 's32[1]{0}', space=sflag, size = 0x4, scoped, tag = 'scoped memory for tpu_custom_call.1']
    #allocation5 [shape = 'u8[16384]{0}', space=vmem, size = 0x4000, scoped, tag = 'input window, operand 1, single buffered']
    #allocation6 [shape = 's32[1]{0}', space=sflag, size = 0x4, scoped, tag = 'scoped memory for tpu_custom_call.1']
    #allocation7 [shape = 'u8[8192]{0}', space=vmem, size = 0x2000, scoped, tag = 'output window, operand 0, single buffered']
    %8 = vsyncpa [#allocation3], 0
    %9 = vsyncpa [#allocation6], 0
    %10 = vsyncpa [#allocation4], 0
    // Predicated region
    $region2: #{tpu_custom_call.1} parent=1 // pred_check
      _
    $region3: #{tpu_custom_call.1} parent=1 // pred_check_branch
      %12 = sbr.rel (0) target = $region5
    $region4: #{tpu_custom_call.1} parent=1 // pred_region
      %14 = vsyncadd [#allocation3], 0
      %s15 = sshll.u32 %s0, 4
      %s16 = int_to_ptr.hbm [resolvable:$true] %s15
      %s17 = sshll.u32 [#allocation2], 4
      %s18 = int_to_ptr.vmem [resolvable:$true] %s17
      %23 = dma.hbm_to_vmem [thread:$0]  %s16, 256, %s18, [#allocation3], 128, 128, 8
    $region5: #{tpu_custom_call.1} parent=1 // pred_fallthru
      _
    // Predicated region
    $region6: #{tpu_custom_call.1} parent=1 // pred_check
      _
    $region7: #{tpu_custom_call.1} parent=1 // pred_check_branch
      %25 = sbr.rel (0) target = $region9
    $region8: #{tpu_custom_call.1} parent=1 // pred_region
      %27 = vsyncadd [#allocation6], 0
      %s28 = sshll.u32 %s1, 4
      %s29 = int_to_ptr.hbm [resolvable:$true] %s28
      %s30 = sshll.u32 [#allocation5], 4
      %s31 = int_to_ptr.vmem [resolvable:$true] %s30
      %36 = dma.hbm_to_vmem [thread:$0]  %s29, 512, %s31, [#allocation6], 128, 128, 8
    $region9: #{tpu_custom_call.1} parent=1 // pred_fallthru
      _
    // Predicated region
    $region10: #{tpu_custom_call.1} parent=1 // pred_check
      _
    $region11: #{tpu_custom_call.1} parent=1 // pred_check_branch
      %38 = sbr.rel (0) target = $region13
    $region12: #{tpu_custom_call.1} parent=1 // pred_region
      _
    $region13: #{tpu_custom_call.1} parent=1 // pred_fallthru
      _
    // Predicated region
    $region14: #{tpu_custom_call.1} parent=1 // pred_check
      _
    $region15: #{tpu_custom_call.1} parent=1 // pred_check_branch
      %40 = sbr.rel (0) target = $region17
    $region16: #{tpu_custom_call.1} parent=1 // pred_region
      %42 = dma.done [#allocation3], 256
    $region17: #{tpu_custom_call.1} parent=1 // pred_fallthru
      _
    // Predicated region
    $region18: #{tpu_custom_call.1} parent=1 // pred_check
      _
    $region19: #{tpu_custom_call.1} parent=1 // pred_check_branch
      %44 = sbr.rel (0) target = $region21
    $region20: #{tpu_custom_call.1} parent=1 // pred_region
      %46 = dma.done [#allocation6], 512
    $region21: #{tpu_custom_call.1} parent=1 // pred_fallthru
      _
    %v47 = vld [vmem:[#allocation2] sm:$0xff]
    %v48 = vld [vmem:[#allocation2 + $0x8] sm:$0xff]
    %v49 = vld [vmem:[#allocation5] sm:$0xff]
    %v50 = vld [vmem:[#allocation5 + $0x8] sm:$0xff]
    %v51 = vld [vmem:[#allocation5 + $0x10] sm:$0xff]
    %v52 = vld [vmem:[#allocation5 + $0x18] sm:$0xff]
    %v53 = vld [vmem:[%s2] sm:$0x1]
    %v55 = vperm.slane %v53, 0
    %vm57 = vcmask 261120
    %v59 = vsel %vm57, %v47, 0
    %v62 = vsel %vm57, %v48, 0
    %64 = vmatpush.msra.mxu0 0.0
    %65 = vmatpush.msra.mxu0 0.0
    %66 = vmatpush.msra.mxu0 0.0
    %67 = vmatpush.msra.mxu0 0.0
    %68 = vmatpush.msra.mxu0 0.0
    %69 = vmatpush.msra.mxu0 0.0
    %70 = vmatpush.msra.mxu0 0.0
    %71 = vmatpush.msra.mxu0 0.0
    %72 = vmatpush.msra.mxu0 0.0
    %73 = vmatpush.msra.mxu0 0.0
    %74 = vmatpush.msra.mxu0 0.0
    %75 = vmatpush.msra.mxu0 0.0
    %76 = vmatpush.msra.mxu0 %v52
    %77 = vmatpush.msra.mxu0 %v51
    %78 = vmatpush.msra.mxu0 %v50
    %79 = vmatpush.msra.mxu0 %v49
    %80 = vmatmul.f32.gmra.mxu0 %v59
    %v81 = vpop.f32.mrf.mxu0
    %v82 = vadd.f32 %v55, %v81
    %83 = vmatmul.f32.gmra.mxu0 %v62
    %v84 = vpop.f32.mrf.mxu0
    %v85 = vadd.f32 %v55, %v84
    %86 = vdwg.mxu0
    %v87 = vmul.f32 %v82, 30.0
    %v88 = vmul.f32 %v85, 30.0
    %v89 = vand.u32 2147483647, %v87
    %vm90 = vcmp.le.f32.partialorder %v89, 0.7853982
    %vm91 = vcmp.lt.s32.totalorder %v87, 0
    %v92 = vand.u32 %v87, 2139095040
    %v93 = vshrl.u32 %v92, 23
    %v94 = vsub.s32 %v93, 127
    %v95 = vand.u32 2147483647, %v87
    %v96 = vand.u32 %v95, 8388607
    %v97 = vor.u32 %v96, 8388608
    %v98 = vsub.s32 0, %v97
    %v99 = vadd.s32 %v94, 1
    %vm100 = vcmp.gt.s32.totalorder %v99, 0
    %v101 = vsel %vm100, %v99, 0
    %v102 = vshrl.u32 %v101, 5
    %v103 = vand.u32 %v101, 31
    %v104 = vsub.s32 32, %v103
    %v105 = vshrl.u32 683565275, %v104
    %v106 = vshll.u32 683565275, %v103
    %v107 = vshrl.u32 2475754826, %v104
    %v108 = vor.u32 %v106, %v107
    %v109 = vshll.u32 2475754826, %v103
    %v110 = vshrl.u32 2131351028, %v104
    %v111 = vor.u32 %v109, %v110
    %v112 = vshll.u32 2131351028, %v103
    %v113 = vshrl.u32 2102212464, %v104
    %v114 = vor.u32 %v112, %v113
    %v115 = vshll.u32 2102212464, %v103
    %v116 = vshrl.u32 920167782, %v104
    %v117 = vor.u32 %v115, %v116
    %v118 = vshll.u32 920167782, %v103
    %v119 = vshrl.u32 1326507024, %v104
    %v120 = vor.u32 %v118, %v119
    %vm121 = vcmp.lt.s32.totalorder %v102, 1
    %vm122 = vcmp.lt.s32.totalorder %v102, 2
    %vm123 = vcmp.lt.s32.totalorder %v102, 3
    %vm124 = vcmp.lt.s32.totalorder %v102, 4
    %v125 = vsel %vm121, %v105, %v108
    %v126 = vsel %vm124, %v114, 2102212464
    %v127 = vsel %vm123, %v111, %v126
    %v128 = vsel %vm122, %v125, %v127
    %v129 = vsel %vm121, %v108, %v111
    %v130 = vsel %vm124, %v117, 920167782
    %v131 = vsel %vm123, %v114, %v130
    %v132 = vsel %vm122, %v129, %v131
    %v133 = vsel %vm121, %v111, %v114
    %v134 = vsel %vm124, %v120, 1326507024
    %v135 = vsel %vm123, %v117, %v134
    %v136 = vsel %vm122, %v133, %v135
    %v137 = vshll.u32 %v97, 8
    %v138 = vand.u32 %v137, 65535
    %v139 = vshrl.u32 %v137, 16
    %v140 = vand.u32 %v136, 65535
    %v141 = vshrl.u32 %v136, 16
    %v142 = vmul.u32 %v138, %v140
    %v143 = vmul.u32 %v138, %v141
    %v144 = vmul.u32 %v139, %v140
    %v145 = vmul.u32 %v139, %v141
    %v146 = vshll.u32 %v143, 16
    %v147 = vshrl.u32 %v143, 16
    %v148 = vshll.u32 %v144, 16
    %v149 = vshrl.u32 %v144, 16
    %vm150 = vc.u32 %v142, %v146
    %v151 = vsel %vm150, 1, 0
    %v152 = vadd.s32 %v142, %v146
    %v153 = vadd.s32 %v145, %v151
    %vm154 = vc.u32 %v152, %v148
    %v155 = vsel %vm154, 1, 0
    %v156 = vadd.s32 %v152, %v148
    %v157 = vadd.s32 %v153, %v155
    %v158 = vadd.s32 %v157, %v147
    %v159 = vadd.s32 %v158, %v149
    %v160 = vand.u32 %v137, 65535
    %v161 = vshrl.u32 %v137, 16
    %v162 = vand.u32 %v132, 65535
    %v163 = vshrl.u32 %v132, 16
    %v164 = vmul.u32 %v160, %v162
    %v165 = vmul.u32 %v160, %v163
    %v166 = vmul.u32 %v161, %v162
    %v167 = vmul.u32 %v161, %v163
    %v168 = vshll.u32 %v165, 16
    %v169 = vshrl.u32 %v165, 16
    %v170 = vshll.u32 %v166, 16
    %v171 = vshrl.u32 %v166, 16
    %vm172 = vc.u32 %v164, %v168
    %v173 = vsel %vm172, 1, 0
    %v174 = vadd.s32 %v164, %v168
    %v175 = vadd.s32 %v167, %v173
    %vm176 = vc.u32 %v174, %v170
    %v177 = vsel %vm176, 1, 0
    %v178 = vadd.s32 %v174, %v170
    %v179 = vadd.s32 %v175, %v177
    %v180 = vadd.s32 %v179, %v169
    %v181 = vadd.s32 %v180, %v171
    %v182 = vmul.u32 %v137, %v128
    %v183 = vadd.s32 %v159, %v178
    %vm184 = vc.u32 %v159, %v178
    %v185 = vadd.s32 %v181, 1
    %v186 = vsel %vm184, %v185, %v181
    %v187 = vadd.s32 %v182, %v186
    %v188 = vadd.s32 %v187, 536870912
    %v189 = vshrl.u32 %v188, 30
    %v190 = vshll.u32 %v189, 30
    %v191 = vsub.s32 %v187, %v190
    %vm192 = vcmp.lt.s32.totalorder %v191, 0
    %v193 = vsub.s32 0, %v191
    %v194 = vsel %vm192, %v193, %v191
    %v195 = vclz %v194
    %v196 = vsub.s32 %v195, 2
    %vm197 = vcmp.gt.s32.totalorder 0, %v196
    %v198 = vsel %vm197, 0, %v196
    %v199 = vsub.s32 32, %v198
    %v200 = vshll.u32 %v191, %v198
    %v201 = vshrl.u32 %v183, %v199
    %v202 = vor.u32 %v200, %v201
    %v203 = vsub.s32 4294967266, %v198
    %v204 = vadd.s32 %v203, 127
    %v205 = vshll.u32 %v204, 23
    %v206 = vor.u32 4788187, %v205
    %v207 = vand.u32 2147483647, %v206
    %v209 = vcvt.s32.f32 %v202
    %v210 = vmul.f32 %v209, %v207
    %v211 = vxor.u32 %v210, 2147483648
    %v212 = vsel %vm91, %v211, %v210
    %v213 = vsub.s32 4, %v189
    %v214 = vsel %vm91, %v213, %v189
    %v215 = vsel %vm90, %v87, %v212
    %v216 = vsel %vm90, 0, %v214
    %v217 = vmul.f32 %v215, %v215
    %v218 = vmul.f32 %v217, -0.001358992
    %v219 = vadd.f32 %v218, 0.041655596
    %v220 = vmul.f32 %v217, %v219
    %v221 = vadd.f32 %v220, -0.4999988
    %v222 = vmul.f32 %v217, %v221
    %v223 = vadd.f32 1.0, %v222
    %v224 = vmul.f32 %v215, %v215
    %v225 = vmul.f32 %v224, -0.00019511016
    %v226 = vadd.f32 %v225, 0.008332121
    %v227 = vmul.f32 %v224, %v226
    %v228 = vadd.f32 %v227, -0.16666654
    %v229 = vmul.f32 %v224, %v228
    %v230 = vadd.f32 %v229, 1.0
    %v231 = vmul.f32 %v230, %v215
    %vm232 = vweird.f32 %v87
    %v233 = vadd.s32 %v216, 3
    %v234 = vand.u32 %v233, 3
    %vm235 = vcmp.lt.s32.totalorder %v234, 2
    %vm236 = vcmp.eq.s32.totalorder %v234, 0
    %v237 = vxor.u32 %v231, 2147483648
    %v238 = vsel %vm236, %v223, %v237
    %vm239 = vcmp.eq.s32.totalorder %v234, 2
    %v240 = vxor.u32 %v223, 2147483648
    %v241 = vsel %vm239, %v240, %v231
    %v242 = vsel %vm235, %v238, %v241
    %v243 = vsel %vm232, nan, %v242
    %v244 = vand.u32 2147483647, %v88
    %vm245 = vcmp.le.f32.partialorder %v244, 0.7853982
    %vm246 = vcmp.lt.s32.totalorder %v88, 0
    %v247 = vand.u32 %v88, 2139095040
    %v248 = vshrl.u32 %v247, 23
    %v249 = vsub.s32 %v248, 127
    %v250 = vand.u32 2147483647, %v88
    %v251 = vand.u32 %v250, 8388607
    %v252 = vor.u32 %v251, 8388608
    %v253 = vsub.s32 0, %v252
    %v254 = vadd.s32 %v249, 1
    %vm255 = vcmp.gt.s32.totalorder %v254, 0
    %v256 = vsel %vm255, %v254, 0
    %v257 = vshrl.u32 %v256, 5
    %v258 = vand.u32 %v256, 31
    %v259 = vsub.s32 32, %v258
    %v260 = vshrl.u32 683565275, %v259
    %v261 = vshll.u32 683565275, %v258
    %v262 = vshrl.u32 2475754826, %v259
    %v263 = vor.u32 %v261, %v262
    %v264 = vshll.u32 2475754826, %v258
    %v265 = vshrl.u32 2131351028, %v259
    %v266 = vor.u32 %v264, %v265
    %v267 = vshll.u32 2131351028, %v258
    %v268 = vshrl.u32 2102212464, %v259
    %v269 = vor.u32 %v267, %v268
    %v270 = vshll.u32 2102212464, %v258
    %v271 = vshrl.u32 920167782, %v259
    %v272 = vor.u32 %v270, %v271
    %v273 = vshll.u32 920167782, %v258
    %v274 = vshrl.u32 1326507024, %v259
    %v275 = vor.u32 %v273, %v274
    %vm276 = vcmp.lt.s32.totalorder %v257, 1
    %vm277 = vcmp.lt.s32.totalorder %v257, 2
    %vm278 = vcmp.lt.s32.totalorder %v257, 3
    %vm279 = vcmp.lt.s32.totalorder %v257, 4
    %v280 = vsel %vm276, %v260, %v263
    %v281 = vsel %vm279, %v269, 2102212464
    %v282 = vsel %vm278, %v266, %v281
    %v283 = vsel %vm277, %v280, %v282
    %v284 = vsel %vm276, %v263, %v266
    %v285 = vsel %vm279, %v272, 920167782
    %v286 = vsel %vm278, %v269, %v285
    %v287 = vsel %vm277, %v284, %v286
    %v288 = vsel %vm276, %v266, %v269
    %v289 = vsel %vm279, %v275, 1326507024
    %v290 = vsel %vm278, %v272, %v289
    %v291 = vsel %vm277, %v288, %v290
    %v292 = vshll.u32 %v252, 8
    %v293 = vand.u32 %v292, 65535
    %v294 = vshrl.u32 %v292, 16
    %v295 = vand.u32 %v291, 65535
    %v296 = vshrl.u32 %v291, 16
    %v297 = vmul.u32 %v293, %v295
    %v298 = vmul.u32 %v293, %v296
    %v299 = vmul.u32 %v294, %v295
    %v300 = vmul.u32 %v294, %v296
    %v301 = vshll.u32 %v298, 16
    %v302 = vshrl.u32 %v298, 16
    %v303 = vshll.u32 %v299, 16
    %v304 = vshrl.u32 %v299, 16
    %vm305 = vc.u32 %v297, %v301
    %v306 = vsel %vm305, 1, 0
    %v307 = vadd.s32 %v297, %v301
    %v308 = vadd.s32 %v300, %v306
    %vm309 = vc.u32 %v307, %v303
    %v310 = vsel %vm309, 1, 0
    %v311 = vadd.s32 %v307, %v303
    %v312 = vadd.s32 %v308, %v310
    %v313 = vadd.s32 %v312, %v302
    %v314 = vadd.s32 %v313, %v304
    %v315 = vand.u32 %v292, 65535
    %v316 = vshrl.u32 %v292, 16
    %v317 = vand.u32 %v287, 65535
    %v318 = vshrl.u32 %v287, 16
    %v319 = vmul.u32 %v315, %v317
    %v320 = vmul.u32 %v315, %v318
    %v321 = vmul.u32 %v316, %v317
    %v322 = vmul.u32 %v316, %v318
    %v323 = vshll.u32 %v320, 16
    %v324 = vshrl.u32 %v320, 16
    %v325 = vshll.u32 %v321, 16
    %v326 = vshrl.u32 %v321, 16
    %vm327 = vc.u32 %v319, %v323
    %v328 = vsel %vm327, 1, 0
    %v329 = vadd.s32 %v319, %v323
    %v330 = vadd.s32 %v322, %v328
    %vm331 = vc.u32 %v329, %v325
    %v332 = vsel %vm331, 1, 0
    %v333 = vadd.s32 %v329, %v325
    %v334 = vadd.s32 %v330, %v332
    %v335 = vadd.s32 %v334, %v324
    %v336 = vadd.s32 %v335, %v326
    %v337 = vmul.u32 %v292, %v283
    %v338 = vadd.s32 %v314, %v333
    %vm339 = vc.u32 %v314, %v333
    %v340 = vadd.s32 %v336, 1
    %v341 = vsel %vm339, %v340, %v336
    %v342 = vadd.s32 %v337, %v341
    %v343 = vadd.s32 %v342, 536870912
    %v344 = vshrl.u32 %v343, 30
    %v345 = vshll.u32 %v344, 30
    %v346 = vsub.s32 %v342, %v345
    %vm347 = vcmp.lt.s32.totalorder %v346, 0
    %v348 = vsub.s32 0, %v346
    %v349 = vsel %vm347, %v348, %v346
    %v350 = vclz %v349
    %v351 = vsub.s32 %v350, 2
    %vm352 = vcmp.gt.s32.totalorder 0, %v351
    %v353 = vsel %vm352, 0, %v351
    %v354 = vsub.s32 32, %v353
    %v355 = vshll.u32 %v346, %v353
    %v356 = vshrl.u32 %v338, %v354
    %v357 = vor.u32 %v355, %v356
    %v358 = vsub.s32 4294967266, %v353
    %v359 = vadd.s32 %v358, 127
    %v360 = vshll.u32 %v359, 23
    %v361 = vor.u32 4788187, %v360
    %v362 = vand.u32 2147483647, %v361
    %v364 = vcvt.s32.f32 %v357
    %v365 = vmul.f32 %v364, %v362
    %v366 = vxor.u32 %v365, 2147483648
    %v367 = vsel %vm246, %v366, %v365
    %v368 = vsub.s32 4, %v344
    %v369 = vsel %vm246, %v368, %v344
    %v370 = vsel %vm245, %v88, %v367
    %v371 = vsel %vm245, 0, %v369
    %v372 = vmul.f32 %v370, %v370
    %v373 = vmul.f32 %v372, -0.001358992
    %v374 = vadd.f32 %v373, 0.041655596
    %v375 = vmul.f32 %v372, %v374
    %v376 = vadd.f32 %v375, -0.4999988
    %v377 = vmul.f32 %v372, %v376
    %v378 = vadd.f32 1.0, %v377
    %v379 = vmul.f32 %v370, %v370
    %v380 = vmul.f32 %v379, -0.00019511016
    %v381 = vadd.f32 %v380, 0.008332121
    %v382 = vmul.f32 %v379, %v381
    %v383 = vadd.f32 %v382, -0.16666654
    %v384 = vmul.f32 %v379, %v383
    %v385 = vadd.f32 %v384, 1.0
    %v386 = vmul.f32 %v385, %v370
    %vm387 = vweird.f32 %v88
    %v388 = vadd.s32 %v371, 3
    %v389 = vand.u32 %v388, 3
    %vm390 = vcmp.lt.s32.totalorder %v389, 2
    %vm391 = vcmp.eq.s32.totalorder %v389, 0
    %v392 = vxor.u32 %v386, 2147483648
    %v393 = vsel %vm391, %v378, %v392
    %vm394 = vcmp.eq.s32.totalorder %v389, 2
    %v395 = vxor.u32 %v378, 2147483648
    %v396 = vsel %vm394, %v395, %v386
    %v397 = vsel %vm390, %v393, %v396
    %v398 = vsel %vm387, nan, %v397
    %399 = vst [vmem:[#allocation7] sm:$0xff] %v243
    %400 = vst [vmem:[#allocation7 + $0x8] sm:$0xff] %v398
    // Predicated region
    $region22: #{tpu_custom_call.1} parent=1 // pred_check
      _
    $region23: #{tpu_custom_call.1} parent=1 // pred_check_branch
      %402 = sbr.rel (0) target = $region25
    $region24: #{tpu_custom_call.1} parent=1 // pred_region
      %404 = vsyncadd [#allocation4], 0
      %s405 = sshll.u32 [#allocation7], 4
      %s406 = int_to_ptr.vmem [resolvable:$true] %s405
      %s407 = sshll.u32 %s3, 4
      %s408 = int_to_ptr.hbm [resolvable:$true] %s407
      %413 = dma.vmem_to_hbm [thread:$0]  %s406, 256, %s408, [#allocation4], 128, 128, 8
    $region25: #{tpu_custom_call.1} parent=1 // pred_fallthru
      _
    // Predicated region
    $region26: #{tpu_custom_call.1} parent=1 // pred_check
      _
    $region27: #{tpu_custom_call.1} parent=1 // pred_check_branch
      %415 = sbr.rel (0) target = $region29
    $region28: #{tpu_custom_call.1} parent=1 // pred_region
      %417 = dma.done [#allocation4], 256
    $region29: #{tpu_custom_call.1} parent=1 // pred_fallthru
      _
    %418 = vsyncpa [#allocation3], 1
    %419 = vsyncpa [#allocation6], 1
    %420 = vsyncpa [#allocation4], 1

</llo_original>
